<compile_context>
chip_gen: v7x
topology: tpu7x:2x2x1
jax: 0.10.0
libtpu: 0.0.40
codegen_flags: <defaults>
</compile_context>

<pallas_src>
import jax
import jax.numpy as jnp
from jax.experimental import pallas as pl
from jax.experimental.pallas import tpu as pltpu

_EPS = 1e-8
_APPROX_RECIP = False
_MAX_TILE_BYTES = 2 * 1024 * 1024   # per-input, per-buffer VMEM budget


def _cdiv(a, b):
    return -(-a // b)


def _round_up(x, m):
    return _cdiv(x, m) * m


def _sublane_align(itemsize):
    if itemsize >= 4:
        return 8
    if itemsize == 2:
        return 16
    return 32


def _choose_tile_rows(b, d, itemsize, max_tile_bytes):
    """Pick the row-tile size: full batch if it fits, else a balanced,
    sublane-aligned split under the per-tile VMEM budget."""
    align = _sublane_align(itemsize)
    max_rows = max(align, max_tile_bytes // max(d * itemsize, 1))
    max_rows = min(max_rows, 4096)
    if b <= max_rows:
        return b                           # single block: full dims are legal
    n_tiles = _cdiv(b, max_rows)
    return _round_up(_cdiv(b, n_tiles), align)


def _make_kernel(tile_rows, total_rows, needs_mask):
    def kernel(scal_ref, mean_ref, var_ref, target_ref,
               loss_ref, het_ref, kl_ref, acc_ref):
        """Accumulates sum(precision*(t-m)^2 + log(var+eps)) over row tiles.

        scal_ref (SMEM, f32[4]) = [1/B, het_scale, gamma, kl_scaled].
        acc_ref  (SMEM, f32[1]) = running scalar sum across grid steps.
        Finalize: base = acc/B ; het = het_scale*base ; loss = het + gamma*kl.
        """
        step = pl.program_id(0)

        @pl.when(step == 0)
        def _init():
            acc_ref[0] = jnp.float32(0.0)

        # Cast to f32 in VMEM (free VPU work hidden under the DMA).
        mean = mean_ref[...].astype(jnp.float32)
        var = var_ref[...].astype(jnp.float32)
        target = target_ref[...].astype(jnp.float32)

        var_eps = var + _EPS                     # computed once, reused
        diff = target - mean
        contrib = (pl.reciprocal(var_eps, approx=_APPROX_RECIP) * diff * diff
                   + jnp.log(var_eps))

        if needs_mask:
            # Ragged last tile: zero out rows past the true batch size.
            row = (jax.lax.broadcasted_iota(jnp.int32, contrib.shape, 0)
                   + step * tile_rows)
            contrib = jnp.where(row < total_rows, contrib, 0.0)

        # Per-tile tree reduce -> scalar; accumulate in SMEM (no full-tile RMW).
        acc_ref[0] += jnp.sum(contrib)

        @pl.when(step == pl.num_programs(0) - 1)
        def _finalize():
            # sum over feature dim then mean over batch == sum(all) / B
            base = acc_ref[0] * scal_ref[0]      # * 1/B
            het = base * scal_ref[1]             # * n_points*mult (or 1)
            kl_scaled = scal_ref[3]
            het_ref[0] = het
            kl_ref[0] = kl_scaled
            loss_ref[0] = het + scal_ref[2] * kl_scaled   # + gamma*kl_scaled

    return kernel


def _regression_loss_fused(mean, var, target, inv_b, het_scale, gamma,
                           kl_scaled, max_tile_bytes=_MAX_TILE_BYTES):
    b, d = target.shape
    itemsizes = [jnp.dtype(x.dtype).itemsize for x in (mean, var, target)]

    tile_rows = _choose_tile_rows(b, d, max(itemsizes), max_tile_bytes)
    if tile_rows != b:
        # Honor the strictest sublane alignment among the input dtypes.
        tile_rows = _round_up(tile_rows, _sublane_align(min(itemsizes)))
    num_tiles = _cdiv(b, tile_rows)
    needs_mask = (b % tile_rows) != 0

    scal = jnp.stack([
        jnp.asarray(inv_b, jnp.float32),
        jnp.asarray(het_scale, jnp.float32),
        jnp.asarray(gamma, jnp.float32),
        jnp.asarray(kl_scaled, jnp.float32),
    ])

    tile_spec = pl.BlockSpec((tile_rows, d), lambda i: (i, 0))
    smem_spec = pl.BlockSpec(memory_space=pltpu.SMEM)
    scalar_out = jax.ShapeDtypeStruct((1,), jnp.float32)

    n_elem = b * d
    cost = pl.CostEstimate(
        flops=6 * n_elem,
        transcendentals=2 * n_elem,                 # log + reciprocal
        bytes_accessed=n_elem * sum(itemsizes) + 4 * 4 + 3 * 4,
    )

    kernel = _make_kernel(tile_rows, b, needs_mask)
    loss, het, kl_out = pl.pallas_call(
        kernel,
        out_shape=(scalar_out, scalar_out, scalar_out),
        grid=(num_tiles,),
        in_specs=[smem_spec, tile_spec, tile_spec, tile_spec],
        out_specs=(smem_spec, smem_spec, smem_spec),
        scratch_shapes=[pltpu.SMEM((1,), jnp.float32)],
        compiler_params=pltpu.CompilerParams(
            dimension_semantics=("arbitrary",),
            vmem_limit_bytes=32 * 1024 * 1024,
        ),
        cost_estimate=cost,
    )(scal, mean, var, target)
    return loss[0], het[0], kl_out[0]


def regression_loss(output, target, kl, gamma, n_batches, n_points,
                    scaling="whole", loss_multiplier=1.0,
                    max_tile_bytes=_MAX_TILE_BYTES):
    """Mirrors RegressionLoss.forward. Returns (loss, heteroscedastic_loss, kl)."""
    mean, var = output[0], output[1]
    b = target.shape[0]
    inv_b = 1.0 / float(b)
    if scaling == "whole":
        het_scale = (jnp.asarray(n_points, jnp.float32)
                     * jnp.asarray(loss_multiplier, jnp.float32))
        kl_scaled = jnp.asarray(kl, jnp.float32) / jnp.float32(n_batches)
    elif scaling == "batch":
        het_scale = jnp.float32(1.0)
        kl_scaled = jnp.asarray(kl, jnp.float32) / jnp.float32(b * n_batches)
    else:
        raise NotImplementedError("Other scaling not implemented!")
    return _regression_loss_fused(mean, var, target, inv_b, het_scale, gamma,
                                  kl_scaled, max_tile_bytes=max_tile_bytes)


if __name__ == "__main__":
    key = jax.random.PRNGKey(0)
    k1, k2, k3 = jax.random.split(key, 3)

    def make_inputs(B, D, dtype=jnp.float32):
        mean = jax.random.normal(k1, (B, D), dtype=jnp.float32)
        # variances must be positive (log / reciprocal)
        var = jax.nn.softplus(jax.random.normal(k2, (B, D), dtype=jnp.float32)) + 0.1
        target = jax.random.normal(k3, (B, D), dtype=jnp.float32)
        return mean.astype(dtype), var.astype(dtype), target.astype(dtype)

    def reference(mean, var, target, kl, gamma, n_batches, n_points, scaling, mult):
        mean = mean.astype(jnp.float32)
        var = var.astype(jnp.float32)
        target = target.astype(jnp.float32)
        prec = 1.0 / (var + _EPS)
        base = jnp.mean(
            jnp.sum(prec * (target - mean) ** 2 + jnp.log(var + _EPS), axis=1),
            axis=0)
        if scaling == "whole":
            het = n_points * base * mult
            kl_s = kl / n_batches
        else:
            het = base
            kl_s = kl / (target.shape[0] * n_batches)
        return het + gamma * kl_s, het, kl_s

    kl = jnp.float32(3.5)
    gamma = jnp.float32(1.0)
    n_batches, n_points, mult = 10, 100, 1.0

    # 1) Small (batch=8, output_dim=32) regressor shape -- single-block path.
    mean, var, target = make_inputs(8, 32)
    for scaling in ("whole", "batch"):
        loss, het, kl_out = regression_loss(
            (mean, var), target, kl, gamma, n_batches, n_points,
            scaling=scaling, loss_multiplier=mult)
        jax.block_until_ready((loss, het, kl_out))
        r_loss, r_het, r_kl = reference(mean, var, target, kl, gamma,
                                        n_batches, n_points, scaling, mult)
        assert jnp.allclose(het, r_het, rtol=1e-5, atol=1e-5), (scaling, het, r_het)
        assert jnp.allclose(loss, r_loss, rtol=1e-5, atol=1e-5), (scaling, loss, r_loss)
        assert jnp.allclose(kl_out, r_kl, rtol=1e-6, atol=1e-6), (scaling, kl_out, r_kl)

    # 2) f32, ragged batch, forced small tiles -> multi-tile + in-kernel mask.
    mean, var, target = make_inputs(250, 384)
    loss, het, kl_out = regression_loss(
        (mean, var), target, kl, gamma, n_batches, n_points,
        scaling="whole", loss_multiplier=mult,
        max_tile_bytes=64 * 384 * 4)
    jax.block_until_ready((loss, het, kl_out))
    r_loss, r_het, r_kl = reference(mean, var, target, kl, gamma,
                                    n_batches, n_points, "whole", mult)
    assert jnp.allclose(het, r_het, rtol=1e-4, atol=1e-3), (het, r_het)
    assert jnp.allclose(loss, r_loss, rtol=1e-4, atol=1e-3), (loss, r_loss)

    # 3) bf16 inputs, ragged batch, forced small tiles -> in-kernel f32 cast,
    #    16-row-aligned sublane tiles.
    mean, var, target = make_inputs(50, 128, dtype=jnp.bfloat16)
    loss, het, kl_out = regression_loss(
        (mean, var), target, kl, gamma, n_batches, n_points,
        scaling="batch", loss_multiplier=mult,
        max_tile_bytes=32 * 128 * 2)
    jax.block_until_ready((loss, het, kl_out))
    r_loss, r_het, r_kl = reference(mean, var, target, kl, gamma,
                                    n_batches, n_points, "batch", mult)
    assert jnp.allclose(het, r_het, rtol=1e-4, atol=1e-3), (het, r_het)
    assert jnp.allclose(loss, r_loss, rtol=1e-4, atol=1e-3), (loss, r_loss)

    print("KERNEL_OK")
</pallas_src>

<mosaic_0001>
module attributes {stable_mosaic.version = 11 : i64} {
  func.func @kernel(%arg0: i32, %arg1: memref<4xf32, #tpu.memory_space<smem>>, %arg2: memref<8x32xf32, #tpu.memory_space<vmem>>, %arg3: memref<8x32xf32, #tpu.memory_space<vmem>>, %arg4: memref<8x32xf32, #tpu.memory_space<vmem>>, %arg5: memref<1xf32, #tpu.memory_space<smem>>, %arg6: memref<1xf32, #tpu.memory_space<smem>>, %arg7: memref<1xf32, #tpu.memory_space<smem>>, %arg8: memref<1xf32, #tpu.memory_space<smem>>) attributes {dimension_semantics = [#tpu.dimension_semantics<arbitrary>], iteration_bounds = array<i64: 1>, scalar_prefetch = 0 : i64, scratch_operands = 1 : i64, tpu.core_type = #tpu.core_type<tc>, window_params = [{transform_indices = @transform_0, window_bounds = array<i64: 4>}, {transform_indices = @transform_1, window_bounds = array<i64: 8, 32>}, {transform_indices = @transform_2, window_bounds = array<i64: 8, 32>}, {transform_indices = @transform_3, window_bounds = array<i64: 8, 32>}, {transform_indices = @transform_4, window_bounds = array<i64: 1>}, {transform_indices = @transform_5, window_bounds = array<i64: 1>}, {transform_indices = @transform_6, window_bounds = array<i64: 1>}]} {
    %c0_i32 = arith.constant 0 : i32
    %0 = arith.cmpi eq, %arg0, %c0_i32 : i32
    %1 = arith.extui %0 : i1 to i32
    %c0_i32_0 = arith.constant 0 : i32
    %2 = arith.cmpi ne, %1, %c0_i32_0 : i32
    scf.if %2 {
      %cst_11 = arith.constant 0.000000e+00 : f32
      %c0_12 = arith.constant 0 : index
      %24 = memref.load %arg8[%c0_12] : memref<1xf32, #tpu.memory_space<smem>>
      memref.store %cst_11, %arg8[%c0_12] : memref<1xf32, #tpu.memory_space<smem>>
    } else {
    }
    %c0 = arith.constant 0 : index
    %c0_1 = arith.constant 0 : index
    %3 = vector.load %arg2[%c0, %c0_1] : memref<8x32xf32, #tpu.memory_space<vmem>>, vector<8x32xf32>
    %c0_2 = arith.constant 0 : index
    %c0_3 = arith.constant 0 : index
    %4 = vector.load %arg3[%c0_2, %c0_3] : memref<8x32xf32, #tpu.memory_space<vmem>>, vector<8x32xf32>
    %c0_4 = arith.constant 0 : index
    %c0_5 = arith.constant 0 : index
    %5 = vector.load %arg4[%c0_4, %c0_5] : memref<8x32xf32, #tpu.memory_space<vmem>>, vector<8x32xf32>
    %cst = arith.constant 9.99999993E-9 : f32
    %6 = vector.broadcast %cst : f32 to vector<8x32xf32>
    %7 = arith.addf %4, %6 : vector<8x32xf32>
    %8 = arith.subf %5, %3 : vector<8x32xf32>
    %9 = tpu.reciprocal %7 : vector<8x32xf32> -> vector<8x32xf32>
    %10 = arith.mulf %9, %8 : vector<8x32xf32>
    %11 = arith.mulf %10, %8 : vector<8x32xf32>
    %12 = math.log %7 : vector<8x32xf32>
    %13 = arith.addf %11, %12 : vector<8x32xf32>
    %c0_6 = arith.constant 0 : index
    %14 = memref.load %arg8[%c0_6] : memref<1xf32, #tpu.memory_space<smem>>
    %15 = vector.shape_cast %13 : vector<8x32xf32> to vector<1x8x32xf32>
    %cst_7 = arith.constant dense<0.000000e+00> : vector<1xf32>
    %16 = vector.multi_reduction <add>, %15, %cst_7 [1, 2] : vector<1x8x32xf32> to vector<1xf32>
    %17 = vector.shape_cast %16 : vector<1xf32> to vector<1x1x1xf32>
    %18 = vector.extract %17[0, 0, 0] : f32 from vector<1x1x1xf32>
    %19 = arith.addf %14, %18 : f32
    %c0_8 = arith.constant 0 : index
    %20 = memref.load %arg8[%c0_8] : memref<1xf32, #tpu.memory_space<smem>>
    memref.store %19, %arg8[%c0_8] : memref<1xf32, #tpu.memory_space<smem>>
    %c0_i32_9 = arith.constant 0 : i32
    %21 = arith.cmpi eq, %arg0, %c0_i32_9 : i32
    %22 = arith.extui %21 : i1 to i32
    %c0_i32_10 = arith.constant 0 : i32
    %23 = arith.cmpi ne, %22, %c0_i32_10 : i32
    scf.if %23 {
      %c0_11 = arith.constant 0 : index
      %24 = memref.load %arg8[%c0_11] : memref<1xf32, #tpu.memory_space<smem>>
      %c0_12 = arith.constant 0 : index
      %25 = memref.load %arg1[%c0_12] : memref<4xf32, #tpu.memory_space<smem>>
      %26 = arith.mulf %24, %25 : f32
      %c1 = arith.constant 1 : index
      %27 = memref.load %arg1[%c1] : memref<4xf32, #tpu.memory_space<smem>>
      %28 = arith.mulf %26, %27 : f32
      %c3 = arith.constant 3 : index
      %29 = memref.load %arg1[%c3] : memref<4xf32, #tpu.memory_space<smem>>
      %c0_13 = arith.constant 0 : index
      %30 = memref.load %arg6[%c0_13] : memref<1xf32, #tpu.memory_space<smem>>
      memref.store %28, %arg6[%c0_13] : memref<1xf32, #tpu.memory_space<smem>>
      %c0_14 = arith.constant 0 : index
      %31 = memref.load %arg7[%c0_14] : memref<1xf32, #tpu.memory_space<smem>>
      memref.store %29, %arg7[%c0_14] : memref<1xf32, #tpu.memory_space<smem>>
      %c2 = arith.constant 2 : index
      %32 = memref.load %arg1[%c2] : memref<4xf32, #tpu.memory_space<smem>>
      %33 = arith.mulf %32, %29 : f32
      %34 = arith.addf %28, %33 : f32
      %c0_15 = arith.constant 0 : index
      %35 = memref.load %arg5[%c0_15] : memref<1xf32, #tpu.memory_space<smem>>
      memref.store %34, %arg5[%c0_15] : memref<1xf32, #tpu.memory_space<smem>>
    } else {
    }
    return
  }
  func.func @transform_0(%arg0: i32) -> i32 {
    %c0_i32 = arith.constant 0 : i32
    %c0_i32_0 = arith.constant 0 : i32
    return %c0_i32 : i32
  }
  func.func @transform_1(%arg0: i32) -> (i32, i32) {
    %c0_i32 = arith.constant 0 : i32
    %c0_i32_0 = arith.constant 0 : i32
    return %arg0, %c0_i32 : i32, i32
  }
  func.func @transform_2(%arg0: i32) -> (i32, i32) {
    %c0_i32 = arith.constant 0 : i32
    %c0_i32_0 = arith.constant 0 : i32
    return %arg0, %c0_i32 : i32, i32
  }
  func.func @transform_3(%arg0: i32) -> (i32, i32) {
    %c0_i32 = arith.constant 0 : i32
    %c0_i32_0 = arith.constant 0 : i32
    return %arg0, %c0_i32 : i32, i32
  }
  func.func @transform_4(%arg0: i32) -> i32 {
    %c0_i32 = arith.constant 0 : i32
    %c0_i32_0 = arith.constant 0 : i32
    return %c0_i32 : i32
  }
  func.func @transform_5(%arg0: i32) -> i32 {
    %c0_i32 = arith.constant 0 : i32
    %c0_i32_0 = arith.constant 0 : i32
    return %c0_i32 : i32
  }
  func.func @transform_6(%arg0: i32) -> i32 {
    %c0_i32 = arith.constant 0 : i32
    %c0_i32_0 = arith.constant 0 : i32
    return %c0_i32 : i32
  }
}

</mosaic_0001>

<llo_original>
// kernel: tpu_custom_call.1
$region0: #{tpu_custom_call.1}
  #allocation0 [shape = 'u32[]', space=smem, size = 0x4, offset = 0x4, fixed_abs, tag = 'smem constant byte address 0x4 - core index']
  #allocation1 [shape = 'u32[144,128]{1,0:T(1,128)}', space=vmem, size = 0x12000, scoped, tag = 'internal scratch']
  #allocation2 [shape = 'f32[1]{0:T(128)}', space=smem, size = 0x200, scoped, tag = 'scratch operand']
  %s0 = inlined_call_operand.hbm [shape: f32[4], index: 0, kind: input, shape index: {}]
  %s1 = inlined_call_operand.hbm [shape: f32[8,32], index: 1, kind: input, shape index: {}]
  %s2 = inlined_call_operand.hbm [shape: f32[8,32], index: 2, kind: input, shape index: {}]
  %s3 = inlined_call_operand.vmem [shape: f32[8,32], index: 3, kind: input, shape index: {}]
  %s4 = inlined_call_operand.hbm [shape: f32[1], index: 4, kind: output, shape index: {0}]
  %s5 = inlined_call_operand.hbm [shape: f32[1], index: 5, kind: output, shape index: {1}]
  %s6 = inlined_call_operand.hbm [shape: f32[1], index: 6, kind: output, shape index: {2}]
  %7 = xla_tuple %s4, %s5, %s6
  %s8 = sld [smem:[#allocation0]]
  $region62: #{tpu_custom_call.1} parent=0
    _
  %s10 = ssub.s32 1, %s8
  %s11 = scalar_select 0, %s10, %s8
  $region1: #{tpu_custom_call.1} parent=0
    #allocation3 [shape = 'u8[512]{0}', space=smem, size = 0x200, scoped, tag = 'input window, operand 0, single buffered']
    #allocation4 [shape = 's32[1]{0}', space=sflag, size = 0x4, scoped, tag = 'scoped memory for tpu_custom_call.1']
    #allocation5 [shape = 's32[1]{0}', space=sflag, size = 0x4, scoped, tag = 'scoped memory for tpu_custom_call.1']
    #allocation6 [shape = 's32[1]{0}', space=sflag, size = 0x4, scoped, tag = 'scoped memory for tpu_custom_call.1']
    #allocation7 [shape = 'u8[4096]{0}', space=vmem, size = 0x1000, scoped, tag = 'input window, operand 1, single buffered']
    #allocation8 [shape = 'u8[4096]{0}', space=vmem, size = 0x1000, scoped, tag = 'input window, operand 2, single buffered']
    #allocation9 [shape = 's32[1]{0}', space=sflag, size = 0x4, scoped, tag = 'scoped memory for tpu_custom_call.1']
    #allocation10 [shape = 'u8[512]{0}', space=smem, size = 0x200, scoped, tag = 'output window, operand 0, single buffered']
    #allocation11 [shape = 'u8[512]{0}', space=smem, size = 0x200, scoped, tag = 'output window, operand 1, single buffered']
    #allocation12 [shape = 's32[1]{0}', space=sflag, size = 0x4, scoped, tag = 'scoped memory for tpu_custom_call.1']
    #allocation13 [shape = 'u8[512]{0}', space=smem, size = 0x200, scoped, tag = 'output window, operand 2, single buffered']
    %12 = vsyncpa [#allocation5], 0
    %13 = vsyncpa [#allocation4], 0
    %14 = vsyncpa [#allocation9], 0
    %15 = vsyncpa [#allocation6], 0
    %16 = vsyncpa [#allocation12], 0
    // Predicated region
    $region2: #{tpu_custom_call.1} parent=1 // pred_check
      _
    $region3: #{tpu_custom_call.1} parent=1 // pred_check_branch
      %18 = sbr.rel (0) target = $region5
    $region4: #{tpu_custom_call.1} parent=1 // pred_region
      %s20 = ssub.s32 16, 16
      %21 = vsyncadd [#allocation5], %s20
      %24 = dma.hbm_to_smem %s0, 16, [#allocation3], [#allocation5]
    $region5: #{tpu_custom_call.1} parent=1 // pred_fallthru
      _
    // Predicated region
    $region6: #{tpu_custom_call.1} parent=1 // pred_check
      _
    $region7: #{tpu_custom_call.1} parent=1 // pred_check_branch
      %26 = sbr.rel (0) target = $region9
    $region8: #{tpu_custom_call.1} parent=1 // pred_region
      %s28 = ssub.s32 128, 128
      %29 = vsyncadd [#allocation4], %s28
      %s31 = sshll.u32 [#allocation7], 4
      %s32 = int_to_ptr.vmem [resolvable:$true] %s31
      %34 = dma.hbm_to_vmem [thread:$0]  %s1, 128, %s32, [#allocation4]
    $region9: #{tpu_custom_call.1} parent=1 // pred_fallthru
      _
    // Predicated region
    $region10: #{tpu_custom_call.1} parent=1 // pred_check
      _
    $region11: #{tpu_custom_call.1} parent=1 // pred_check_branch
      %36 = sbr.rel (0) target = $region13
    $region12: #{tpu_custom_call.1} parent=1 // pred_region
      %s38 = ssub.s32 128, 128
      %39 = vsyncadd [#allocation9], %s38
      %s41 = sshll.u32 [#allocation8], 4
      %s42 = int_to_ptr.vmem [resolvable:$true] %s41
      %44 = dma.hbm_to_vmem [thread:$0]  %s2, 128, %s42, [#allocation9]
    $region13: #{tpu_custom_call.1} parent=1 // pred_fallthru
      _
    // Predicated region
    $region14: #{tpu_custom_call.1} parent=1 // pred_check
      _
    $region15: #{tpu_custom_call.1} parent=1 // pred_check_branch
      %46 = sbr.rel (0) target = $region17
    $region16: #{tpu_custom_call.1} parent=1 // pred_region
      _
    $region17: #{tpu_custom_call.1} parent=1 // pred_fallthru
      _
    // Predicated region
    $region18: #{tpu_custom_call.1} parent=1 // pred_check
      _
    $region19: #{tpu_custom_call.1} parent=1 // pred_check_branch
      %48 = sbr.rel (0) target = $region21
    $region20: #{tpu_custom_call.1} parent=1 // pred_region
      %49 = dma.done [#allocation5], 16
    $region21: #{tpu_custom_call.1} parent=1 // pred_fallthru
      _
    // Predicated region
    $region22: #{tpu_custom_call.1} parent=1 // pred_check
      _
    $region23: #{tpu_custom_call.1} parent=1 // pred_check_branch
      %51 = sbr.rel (0) target = $region25
    $region24: #{tpu_custom_call.1} parent=1 // pred_region
      %52 = dma.done [#allocation4], 128
    $region25: #{tpu_custom_call.1} parent=1 // pred_fallthru
      _
    // Predicated region
    $region26: #{tpu_custom_call.1} parent=1 // pred_check
      _
    $region27: #{tpu_custom_call.1} parent=1 // pred_check_branch
      %54 = sbr.rel (0) target = $region29
    $region28: #{tpu_custom_call.1} parent=1 // pred_region
      %55 = dma.done [#allocation9], 128
    $region29: #{tpu_custom_call.1} parent=1 // pred_fallthru
      _
    %56 = sfence
    %p57 = scmp.eq.s32.totalorder 0, 0
    // Predicated region
    $region30: #{tpu_custom_call.1} parent=1 // pred_check
      %p58 = pneg %p57
    $region31: #{tpu_custom_call.1} parent=1 // pred_check_branch
      %60 = sbr.rel (%p58) target = $region33
    $region32: #{tpu_custom_call.1} parent=1 // pred_region
      %s61 = scalar_lea.smem [#allocation2], 0
      %62 = sst [smem:[%s61]] 0.0
    $region33: #{tpu_custom_call.1} parent=1 // pred_fallthru
      _
    %v63 = vld [vmem:[#allocation7] sm:$0xff]
    %v64 = vld [vmem:[#allocation8] sm:$0xff]
    %v65 = vld [vmem:[%s3] sm:$0xff]
    %v66 = vadd.f32 %v64, 1e-08
    %v67 = vsub.f32 %v65, %v63
    %v68 = vrcp.pop %v66
    %v69 = vmul.f32 %v68, %v67
    %v70 = vmul.f32 %v69, %v67
    %v71 = vlog2.pop %v66
    %v72 = vmul.f32 %v71, 0.6931472
    %v73 = vadd.f32 %v70, %v72
    %s74 = sld [smem:[#allocation2]]
    %vm75 = vcmask 261120
    %v76 = vsel %vm75, %v73, 0.0
    %77 = vadd.xlane.f32.xlu0 %v76
    %v78 = vpop.xlane.xlu0 %77
    %v79 = vrot.slane %v78, 4
    %v80 = vadd.f32 %v78, %v79
    %v81 = vrot.slane %v80, 2
    %v82 = vadd.f32 %v80, %v81
    %v83 = vrot.slane %v82, 1
    %v84 = vadd.f32 %v82, %v83
    %s85 = vtos %v84
    %s86 = sadd.f32 %s74, %s85
    %s87 = scalar_lea.smem [#allocation2], 0
    %88 = sst [smem:[%s87]] %s86
    // Predicated region
    $region34: #{tpu_custom_call.1} parent=1 // pred_check
      %p89 = pneg %p57
    $region35: #{tpu_custom_call.1} parent=1 // pred_check_branch
      %91 = sbr.rel (%p89) target = $region37
    $region36: #{tpu_custom_call.1} parent=1 // pred_region
      %s92 = sld [smem:[#allocation2]]
      %s93 = sld [smem:[#allocation3]]
      %s94 = smul.f32 %s92, %s93
      %s95 = sld [smem:[#allocation3 + $0x1]]
      %s96 = smul.f32 %s94, %s95
      %s97 = sld [smem:[#allocation3 + $0x3]]
      %s98 = scalar_lea.smem [#allocation11], 0
      %99 = sst [smem:[%s98]] %s96
      %s100 = scalar_lea.smem [#allocation13], 0
      %101 = sst [smem:[%s100]] %s97
      %s102 = sld [smem:[#allocation3 + $0x2]]
      %s103 = smul.f32 %s102, %s97
      %s104 = sadd.f32 %s96, %s103
      %s105 = scalar_lea.smem [#allocation10], 0
      %106 = sst [smem:[%s105]] %s104
    $region37: #{tpu_custom_call.1} parent=1 // pred_fallthru
      _
    // Predicated region
    $region38: #{tpu_custom_call.1} parent=1 // pred_check
      _
    $region39: #{tpu_custom_call.1} parent=1 // pred_check_branch
      %108 = sbr.rel (0) target = $region41
    $region40: #{tpu_custom_call.1} parent=1 // pred_region
      %s110 = ssub.s32 16, 16
      %111 = vsyncadd [#allocation6], %s110
      %114 = dma.smem_to_hbm [#allocation10], 16, %s4, [#allocation6]
    $region41: #{tpu_custom_call.1} parent=1 // pred_fallthru
      _
    // Predicated region
    $region42: #{tpu_custom_call.1} parent=1 // pred_check
      _
    $region43: #{tpu_custom_call.1} parent=1 // pred_check_branch
      %116 = sbr.rel (0) target = $region45
    $region44: #{tpu_custom_call.1} parent=1 // pred_region
      %s118 = ssub.s32 16, 16
      %119 = vsyncadd [#allocation12], %s118
      %122 = dma.smem_to_hbm [#allocation11], 16, %s5, [#allocation12]
    $region45: #{tpu_custom_call.1} parent=1 // pred_fallthru
      _
    // Predicated region
    $region46: #{tpu_custom_call.1} parent=1 // pred_check
      _
    $region47: #{tpu_custom_call.1} parent=1 // pred_check_branch
      %124 = sbr.rel (0) target = $region49
    $region48: #{tpu_custom_call.1} parent=1 // pred_region
      %s126 = ssub.s32 16, 16
      %127 = vsyncadd [#allocation12], %s126
      %130 = dma.smem_to_hbm [#allocation13], 16, %s6, [#allocation12]
    $region49: #{tpu_custom_call.1} parent=1 // pred_fallthru
      _
    // Predicated region
    $region50: #{tpu_custom_call.1} parent=1 // pred_check
      _
    $region51: #{tpu_custom_call.1} parent=1 // pred_check_branch
      %132 = sbr.rel (0) target = $region53
    $region52: #{tpu_custom_call.1} parent=1 // pred_region
      %133 = dma.done [#allocation6], 16
    $region53: #{tpu_custom_call.1} parent=1 // pred_fallthru
      _
    // Predicated region
    $region54: #{tpu_custom_call.1} parent=1 // pred_check
      _
    $region55: #{tpu_custom_call.1} parent=1 // pred_check_branch
      %135 = sbr.rel (0) target = $region57
    $region56: #{tpu_custom_call.1} parent=1 // pred_region
      %136 = dma.done [#allocation12], 16
    $region57: #{tpu_custom_call.1} parent=1 // pred_fallthru
      _
    // Predicated region
    $region58: #{tpu_custom_call.1} parent=1 // pred_check
      _
    $region59: #{tpu_custom_call.1} parent=1 // pred_check_branch
      %138 = sbr.rel (0) target = $region61
    $region60: #{tpu_custom_call.1} parent=1 // pred_region
      %139 = dma.done [#allocation12], 16
    $region61: #{tpu_custom_call.1} parent=1 // pred_fallthru
      _
    %140 = sfence
    %141 = vsyncpa [#allocation4], 1
    %142 = vsyncpa [#allocation9], 1
    %143 = vsyncpa [#allocation5], 1
    %144 = vsyncpa [#allocation6], 1
    %145 = vsyncpa [#allocation12], 1

</llo_original>
